<compile_context>
chip_gen: v7x
topology: tpu7x:2x2x1
jax: 0.10.0
libtpu: 0.0.40
codegen_flags: <defaults>
</compile_context>

<pallas_src>
import jax
import jax.numpy as jnp
from jax import lax
from jax.experimental import pallas as pl
from jax.experimental.pallas import tpu as pltpu

TEMP = 0.1                      # cfg.pretrain_ecg.temperature
INV_TEMP = float(1.0 / TEMP)
EPS = 1e-12                     # F.normalize default eps
_HIGHEST = lax.Precision.HIGHEST


def _normalize(x):
    # F.normalize(x, dim=-1): x / max(||x||_2, eps)
    nrm = jnp.sqrt(jnp.sum(x * x, axis=-1, keepdims=True))
    return x / jnp.maximum(nrm, EPS)


def _loss_tile_kernel(ownT_ref, othT_ref, q_ref, pos_ref, out_ref):
    # Everything arrives pre-normalized (hoisted to the wrapper).
    ownT = ownT_ref[...]                 # (D, N)  same-view keys, transposed
    othT = othT_ref[...]                 # (D, N)  diff-view keys, transposed
    qs = q_ref[...] * INV_TEMP           # (TQ, D) 1/temp folded into the query
    pp = pos_ref[...]                    # (TQ, D) positive partners

    # Plain [TQ,D] x [D,N] MXU matmuls (no transposed-RHS dot_general form).
    # precision=HIGH (bf16_3x) is unsupported by Mosaic dot_general lowering,
    # so HIGHEST (f32) is kept.
    d = jnp.dot(qs, othT, precision=_HIGHEST,
                preferred_element_type=jnp.float32)          # (TQ, N) diff-view
    s = jnp.dot(qs, ownT, precision=_HIGHEST,
                preferred_element_type=jnp.float32)          # (TQ, N) same-view

    mx_d = jnp.max(d, axis=-1, keepdims=True)
    sum_d = jnp.sum(jnp.exp(d - mx_d), axis=-1, keepdims=True)

    # For unit-norm rows the same-view row max is the diagonal = 1/temp, so the
    # stable-softmax shift is the constant INV_TEMP and the diagonal term
    # removed by fill_diagonal_(0) is exactly exp(0) = 1.
    sum_s = jnp.sum(jnp.exp(s - INV_TEMP), axis=-1, keepdims=True) - 1.0

    # Positive logit = <q_i, partner_i> / temp, mask-free row-wise dot.
    pos = jnp.sum(qs * pp, axis=-1, keepdims=True)

    # log(exp(pos - mx_d) / (sum_d + sum_s)) in the log domain.  Mirrors the
    # reference exactly, including its mixed-max denominator.
    li = (pos - mx_d) - jnp.log(sum_d + sum_s)               # (TQ, 1)

    # Lane-dense per-tile partial sum (one unmasked vreg store).
    out_ref[...] = jnp.full(out_ref.shape, jnp.sum(li), dtype=out_ref.dtype)


def _pick_tile(n):
    # TQ must divide N; 256 is a safe cross-generation default.
    for tq in (256, 128, 64, 32, 16, 8):
        if n % tq == 0:
            return tq
    return n


def unimodal_unsup_con_loss(proj, tq=None):
    """proj: (B, D) float, B even. Returns scalar float32 loss."""
    B, D = proj.shape
    assert B % 2 == 0, "batch must be even (two views stacked along dim 0)"
    N = B // 2
    if tq is None:
        tq = _pick_tile(N)
    assert N % tq == 0
    tiles = N // tq

    # Hoisted one-time work (plain XLA): f32 L2-normalize and a key transpose
    # so the kernel sees (2, D, N) keys lane-dense along N.
    proj3n = _normalize(proj.astype(jnp.float32).reshape(2, N, D))   # (2, N, D)
    projT = jnp.swapaxes(proj3n, 1, 2)                               # (2, D, N)

    # Rough per-step VMEM (double-buffered inputs + logit intermediates),
    # capped at 48 MiB so v7x (64 MiB physical per core) keeps headroom while
    # still raising the default scoped limit on v5e/v6e.
    est_bytes = (2 * 2 * N * D          # own^T + oth^T, 2 pipeline buffers each
                 + 2 * 2 * tq * D       # q + pos slabs
                 + 4 * tq * N           # d, s and their exp temporaries
                 + 2 * 8 * 128) * 4
    vmem_limit = int(min(max(2 * est_bytes, 32 * 1024 * 1024),
                         48 * 1024 * 1024))

    parts = pl.pallas_call(
        _loss_tile_kernel,
        grid=(2, tiles),
        in_specs=[
            pl.BlockSpec((None, D, N), lambda h, t: (h, 0, 0)),       # own keys^T
            pl.BlockSpec((None, D, N), lambda h, t: (1 - h, 0, 0)),   # other keys^T
            pl.BlockSpec((None, tq, D), lambda h, t: (h, t, 0)),      # query slab
            pl.BlockSpec((None, tq, D), lambda h, t: (1 - h, t, 0)),  # positive slab
        ],
        out_specs=pl.BlockSpec((None, None, 8, 128), lambda h, t: (h, t, 0, 0)),
        out_shape=jax.ShapeDtypeStruct((2, tiles, 8, 128), jnp.float32),
        compiler_params=pltpu.CompilerParams(
            dimension_semantics=("parallel", "parallel"),
            vmem_limit_bytes=vmem_limit,
        ),
    )(projT, projT, proj3n, proj3n)

    # loss = 0.5 * (mean over half 1 + mean over half 2) = sum(all rows) / B
    return -jnp.sum(parts[:, :, 0, 0]) / B


def _reference(proj, temp=TEMP):
    # pure-JAX mirror of the PyTorch forward, for a correctness check
    B = proj.shape[0]
    N = B // 2
    p1 = _normalize(proj[:N].astype(jnp.float32))
    p2 = _normalize(proj[N:].astype(jnp.float32))

    def one(a, b):
        d = jnp.dot(a, b.T, precision=_HIGHEST) / temp
        d = d - jnp.max(d, axis=1, keepdims=True)
        ed = jnp.exp(d)
        sum_d = ed.sum(-1)
        pos = jnp.diagonal(ed)
        s = jnp.dot(a, a.T, precision=_HIGHEST) / temp
        s = s - jnp.max(s, axis=1, keepdims=True)
        es = jnp.exp(s) * (1.0 - jnp.eye(a.shape[0], dtype=jnp.float32))
        sum_s = es.sum(-1)
        return -jnp.mean(jnp.log(pos / (sum_d + sum_s)))

    return 0.5 * (one(p1, p2) + one(p2, p1))


if __name__ == "__main__":
    key = jax.random.PRNGKey(0)
    B, D = 8, 32  # batch (must be even), projection dim
    proj = jax.random.normal(key, (B, D), dtype=jnp.float32)

    loss = unimodal_unsup_con_loss(proj)
    jax.block_until_ready(loss)

    ref = _reference(proj)
    assert jnp.allclose(loss, ref, atol=1e-5, rtol=1e-5), (loss, ref)

    print("KERNEL_OK")
</pallas_src>

<mosaic_0001>
module attributes {stable_mosaic.version = 11 : i64} {
  func.func @_loss_tile_kernel(%arg0: i32, %arg1: i32, %arg2: memref<1x32x4xf32, #tpu.memory_space<vmem>>, %arg3: memref<1x32x4xf32, #tpu.memory_space<vmem>>, %arg4: memref<1x4x32xf32, #tpu.memory_space<vmem>>, %arg5: memref<1x4x32xf32, #tpu.memory_space<vmem>>, %arg6: memref<1x1x8x128xf32, #tpu.memory_space<vmem>>) attributes {dimension_semantics = [#tpu.dimension_semantics<parallel>, #tpu.dimension_semantics<parallel>], iteration_bounds = array<i64: 2, 1>, scalar_prefetch = 0 : i64, scratch_operands = 0 : i64, tpu.core_type = #tpu.core_type<tc>, window_params = [{transform_indices = @transform_0, window_bounds = array<i64: 1, 32, 4>}, {transform_indices = @transform_1, window_bounds = array<i64: 1, 32, 4>}, {transform_indices = @transform_2, window_bounds = array<i64: 1, 4, 32>}, {transform_indices = @transform_3, window_bounds = array<i64: 1, 4, 32>}, {transform_indices = @transform_4, window_bounds = array<i64: 1, 1, 8, 128>}]} {
    %c0 = arith.constant 0 : index
    %c0_0 = arith.constant 0 : index
    %c0_1 = arith.constant 0 : index
    %0 = vector.load %arg2[%c0, %c0_0, %c0_1] : memref<1x32x4xf32, #tpu.memory_space<vmem>>, vector<1x32x4xf32>
    %1 = vector.shape_cast %0 : vector<1x32x4xf32> to vector<32x4xf32>
    %c0_2 = arith.constant 0 : index
    %c0_3 = arith.constant 0 : index
    %c0_4 = arith.constant 0 : index
    %2 = vector.load %arg3[%c0_2, %c0_3, %c0_4] : memref<1x32x4xf32, #tpu.memory_space<vmem>>, vector<1x32x4xf32>
    %3 = vector.shape_cast %2 : vector<1x32x4xf32> to vector<32x4xf32>
    %c0_5 = arith.constant 0 : index
    %c0_6 = arith.constant 0 : index
    %c0_7 = arith.constant 0 : index
    %4 = vector.load %arg4[%c0_5, %c0_6, %c0_7] : memref<1x4x32xf32, #tpu.memory_space<vmem>>, vector<1x4x32xf32>
    %5 = vector.shape_cast %4 : vector<1x4x32xf32> to vector<4x32xf32>
    %cst = arith.constant 1.000000e+01 : f32
    %6 = vector.broadcast %cst : f32 to vector<4x32xf32>
    %7 = arith.mulf %5, %6 : vector<4x32xf32>
    %c0_8 = arith.constant 0 : index
    %c0_9 = arith.constant 0 : index
    %c0_10 = arith.constant 0 : index
    %8 = vector.load %arg5[%c0_8, %c0_9, %c0_10] : memref<1x4x32xf32, #tpu.memory_space<vmem>>, vector<1x4x32xf32>
    %9 = vector.shape_cast %8 : vector<1x4x32xf32> to vector<4x32xf32>
    %cst_11 = arith.constant dense<0.000000e+00> : vector<4x4xf32>
    %10 = tpu.matmul %7, %3, %cst_11 {dimension_numbers = #tpu.dot_dimension_numbers<[1], [0], [0], [1], [0, 0, 1, 1], [], []>, precision = #tpu.contract_precision<fp32>} : vector<4x32xf32>, vector<32x4xf32>, vector<4x4xf32> -> vector<4x4xf32>
    %cst_12 = arith.constant dense<0.000000e+00> : vector<4x4xf32>
    %11 = tpu.matmul %7, %1, %cst_12 {dimension_numbers = #tpu.dot_dimension_numbers<[1], [0], [0], [1], [0, 0, 1, 1], [], []>, precision = #tpu.contract_precision<fp32>} : vector<4x32xf32>, vector<32x4xf32>, vector<4x4xf32> -> vector<4x4xf32>
    %cst_13 = arith.constant dense<0xFF800000> : vector<4xf32>
    %12 = vector.multi_reduction <maximumf>, %10, %cst_13 [1] : vector<4x4xf32> to vector<4xf32>
    %13 = vector.shape_cast %12 : vector<4xf32> to vector<4x1xf32>
    %14 = vector.broadcast %13 : vector<4x1xf32> to vector<4x4xf32>
    %15 = arith.subf %10, %14 : vector<4x4xf32>
    %16 = math.exp %15 : vector<4x4xf32>
    %cst_14 = arith.constant dense<0.000000e+00> : vector<4xf32>
    %17 = vector.multi_reduction <add>, %16, %cst_14 [1] : vector<4x4xf32> to vector<4xf32>
    %18 = vector.shape_cast %17 : vector<4xf32> to vector<4x1xf32>
    %cst_15 = arith.constant 1.000000e+01 : f32
    %19 = vector.broadcast %cst_15 : f32 to vector<4x4xf32>
    %20 = arith.subf %11, %19 : vector<4x4xf32>
    %21 = math.exp %20 : vector<4x4xf32>
    %cst_16 = arith.constant dense<0.000000e+00> : vector<4xf32>
    %22 = vector.multi_reduction <add>, %21, %cst_16 [1] : vector<4x4xf32> to vector<4xf32>
    %23 = vector.shape_cast %22 : vector<4xf32> to vector<4x1xf32>
    %cst_17 = arith.constant 1.000000e+00 : f32
    %24 = vector.broadcast %cst_17 : f32 to vector<4x1xf32>
    %25 = arith.subf %23, %24 : vector<4x1xf32>
    %26 = arith.mulf %7, %9 : vector<4x32xf32>
    %cst_18 = arith.constant dense<0.000000e+00> : vector<4xf32>
    %27 = vector.multi_reduction <add>, %26, %cst_18 [1] : vector<4x32xf32> to vector<4xf32>
    %28 = vector.shape_cast %27 : vector<4xf32> to vector<4x1xf32>
    %29 = arith.subf %28, %13 : vector<4x1xf32>
    %30 = arith.addf %18, %25 : vector<4x1xf32>
    %31 = math.log %30 : vector<4x1xf32>
    %32 = arith.subf %29, %31 : vector<4x1xf32>
    %33 = vector.shape_cast %32 : vector<4x1xf32> to vector<1x4x1xf32>
    %cst_19 = arith.constant dense<0.000000e+00> : vector<1xf32>
    %34 = vector.multi_reduction <add>, %33, %cst_19 [1, 2] : vector<1x4x1xf32> to vector<1xf32>
    %35 = vector.shape_cast %34 : vector<1xf32> to vector<1x1x1xf32>
    %36 = vector.extract %35[0, 0, 0] : f32 from vector<1x1x1xf32>
    %37 = vector.broadcast %36 : f32 to vector<8x128xf32>
    %c0_20 = arith.constant 0 : index
    %c0_21 = arith.constant 0 : index
    %c0_22 = arith.constant 0 : index
    %c0_23 = arith.constant 0 : index
    %38 = vector.load %arg6[%c0_20, %c0_21, %c0_22, %c0_23] : memref<1x1x8x128xf32, #tpu.memory_space<vmem>>, vector<1x1x8x128xf32>
    %39 = vector.shape_cast %38 : vector<1x1x8x128xf32> to vector<8x128xf32>
    %40 = vector.shape_cast %37 : vector<8x128xf32> to vector<1x1x8x128xf32>
    tpu.vector_store %arg6[%c0_20, %c0_21, %c0_22, %c0_23], %40 {strides = array<i32>} : memref<1x1x8x128xf32, #tpu.memory_space<vmem>>, vector<1x1x8x128xf32>,
    return
  }
  func.func @transform_0(%arg0: i32, %arg1: i32) -> (i32, i32, i32) {
    %c0_i32 = arith.constant 0 : i32
    %c0_i32_0 = arith.constant 0 : i32
    %c0_i32_1 = arith.constant 0 : i32
    return %arg0, %c0_i32, %c0_i32_0 : i32, i32, i32
  }
  func.func @transform_1(%arg0: i32, %arg1: i32) -> (i32, i32, i32) {
    %c1_i32 = arith.constant 1 : i32
    %0 = arith.subi %c1_i32, %arg0 : i32
    %c0_i32 = arith.constant 0 : i32
    %c0_i32_0 = arith.constant 0 : i32
    %c0_i32_1 = arith.constant 0 : i32
    return %0, %c0_i32, %c0_i32_0 : i32, i32, i32
  }
  func.func @transform_2(%arg0: i32, %arg1: i32) -> (i32, i32, i32) {
    %c0_i32 = arith.constant 0 : i32
    %c0_i32_0 = arith.constant 0 : i32
    return %arg0, %arg1, %c0_i32 : i32, i32, i32
  }
  func.func @transform_3(%arg0: i32, %arg1: i32) -> (i32, i32, i32) {
    %c1_i32 = arith.constant 1 : i32
    %0 = arith.subi %c1_i32, %arg0 : i32
    %c0_i32 = arith.constant 0 : i32
    %c0_i32_0 = arith.constant 0 : i32
    return %0, %arg1, %c0_i32 : i32, i32, i32
  }
  func.func @transform_4(%arg0: i32, %arg1: i32) -> (i32, i32, i32, i32) {
    %c0_i32 = arith.constant 0 : i32
    %c0_i32_0 = arith.constant 0 : i32
    %c0_i32_1 = arith.constant 0 : i32
    return %arg0, %arg1, %c0_i32, %c0_i32_0 : i32, i32, i32, i32
  }
}

</mosaic_0001>

<llo_original>
// kernel: tpu_custom_call.1
$region0: #{tpu_custom_call.1}
  #allocation0 [shape = 'u32[]', space=smem, size = 0x4, offset = 0x4, fixed_abs, tag = 'smem constant byte address 0x4 - core index']
  #allocation1 [shape = 'u32[144,128]{1,0:T(1,128)}', space=vmem, size = 0x12000, scoped, tag = 'internal scratch']
  %s0 = inlined_call_operand.vmem [shape: f32[2,32,4], index: 0, kind: input, shape index: {}]
  %s1 = inlined_call_operand.vmem [shape: f32[2,32,4], index: 1, kind: input, shape index: {}]
  %s2 = inlined_call_operand.vmem [shape: f32[2,4,32], index: 2, kind: input, shape index: {}]
  %s3 = inlined_call_operand.vmem [shape: f32[2,4,32], index: 3, kind: input, shape index: {}]
  %s4 = inlined_call_operand.hbm [shape: f32[2,1,8,128], index: 4, kind: output, shape index: {}]
  %s5 = sld [smem:[#allocation0]]
  $region49: #{tpu_custom_call.1} parent=0
    _
  %s7 = ssub.s32 1, %s5
  %s8 = scalar_select 0, %s7, %s5
  $region1: #{tpu_custom_call.1} parent=0
    #allocation2 [shape = 'u8[8192]{0}', space=vmem, size = 0x2000, scoped, tag = 'output window, operand 0']
    #allocation3 [shape = 's32[2]{0}', space=sflag, size = 0x8, scoped, tag = 'scoped memory for tpu_custom_call.1']
    %9 = vsyncpa [#allocation3], 0
    %s10 = scalar_lea.sflag [#allocation3], 1
    %11 = vsyncpa %s10, 0
    loop: start=0, step=1, limit=4
    $region2: #{tpu_custom_call.1} parent=1 // loop_pre_header
      _
    $region3: #{tpu_custom_call.1} parent=1 // loop_header
      %s13 = sphi 0, %s17
      %p14 = scmp.ge.s32.totalorder %s13, 4
      %s20 = sphi 0, %s32
      %s21 = sphi 0, %s28
      %s22 = sphi 0, %s20
      %s23 = sphi 0, %s21
      %s24 = sphi 0, %s22
      %s25 = sphi 0, %s23
      %s35 = sphi 0, %s37
      %s38 = sphi 0, %s35
      %s39 = sphi 0, %s38
      %s55 = sphi 0, %s39
      %s63 = sphi 0, %s65
      %s66 = sphi 0, %s63
      %s67 = sphi 0, %s66
      %s83 = sphi 0, %s67
      %s91 = sphi 0, %s93
      %s94 = sphi 0, %s91
      %s95 = sphi 0, %s94
      %s111 = sphi 0, %s95
      %s121 = sphi 0, %s123
      %s124 = sphi 0, %s121
      %s125 = sphi 0, %s124
      %s141 = sphi 0, %s125
      %s149 = sphi 0, %s151
      %s152 = sphi 0, %s149
      %s153 = sphi 0, %s152
      %s169 = sphi 0, %s153
    $region4: #{tpu_custom_call.1} parent=1 // loop_header_branch
      %16 = sbr.rel (%p14) target = $region8
    $region5: #{tpu_custom_call.1} parent=1 // loop_body
      %s18 = ssub.s32 %s13, 1
      %s19 = ssub.s32 %s13, 2
      %s26 = sadd.s32 1, %s21
      %p27 = scmp.ge.s32.totalorder %s26, 1
      %s28 = scalar_select %p27, 0, %s26
      %s29 = sadd.s32 1, %s20
      %s30 = scalar_select %p27, %s29, %s20
      %p31 = scmp.ge.s32.totalorder %s30, 2
      %s32 = scalar_select %p31, 0, %s30
      %s33 = ssub.s32 %s20, %s32
      %p34 = scmp.eq.s32.totalorder %s33, 0
      %s36 = sadd.s32 %s35, 1
      %s37 = scalar_select %p34, %s35, %s36
      %p40 = pneg %p34
      %p41 = scmp.eq.s32.totalorder %s13, 1
      %p42 = por %p40, %p41
      %p43 = scmp.ne.s32.totalorder %s35, %s38
      %p44 = scmp.eq.s32.totalorder %s13, 0
      %p45 = por %p43, %p44
      %p46 = scmp.ne.s32.totalorder %s35, %s38
      %p47 = scmp.eq.s32.totalorder %s18, 1
      %p48 = por %p46, %p47
      %p49 = scmp.ne.s32.totalorder %s38, %s39
      %p50 = scmp.eq.s32.totalorder %s18, 0
      %p51 = por %p49, %p50
      %p52 = scmp.ne.s32.totalorder %s38, %s39
      %p53 = scmp.eq.s32.totalorder %s19, 1
      %p54 = por %p52, %p53
      %p56 = scmp.ne.s32.totalorder %s39, %s55
      %p57 = scmp.eq.s32.totalorder %s19, 0
      %p58 = por %p56, %p57
      %s59 = ssub.s32 1, %s20
      %s60 = ssub.s32 1, %s32
      %s61 = ssub.s32 %s59, %s60
      %p62 = scmp.eq.s32.totalorder %s61, 0
      %s64 = sadd.s32 %s63, 1
      %s65 = scalar_select %p62, %s63, %s64
      %p68 = pneg %p62
      %p69 = scmp.eq.s32.totalorder %s13, 1
      %p70 = por %p68, %p69
      %p71 = scmp.ne.s32.totalorder %s63, %s66
      %p72 = scmp.eq.s32.totalorder %s13, 0
      %p73 = por %p71, %p72
      %p74 = scmp.ne.s32.totalorder %s63, %s66
      %p75 = scmp.eq.s32.totalorder %s18, 1
      %p76 = por %p74, %p75
      %p77 = scmp.ne.s32.totalorder %s66, %s67
      %p78 = scmp.eq.s32.totalorder %s18, 0
      %p79 = por %p77, %p78
      %p80 = scmp.ne.s32.totalorder %s66, %s67
      %p81 = scmp.eq.s32.totalorder %s19, 1
      %p82 = por %p80, %p81
      %p84 = scmp.ne.s32.totalorder %s67, %s83
      %p85 = scmp.eq.s32.totalorder %s19, 0
      %p86 = por %p84, %p85
      %s87 = ssub.s32 %s20, %s32
      %s88 = ssub.s32 %s21, %s28
      %s89 = sor.u32 %s87, %s88
      %p90 = scmp.eq.s32.totalorder %s89, 0
      %s92 = sadd.s32 %s91, 1
      %s93 = scalar_select %p90, %s91, %s92
      %p96 = pneg %p90
      %p97 = scmp.eq.s32.totalorder %s13, 1
      %p98 = por %p96, %p97
      %p99 = scmp.ne.s32.totalorder %s91, %s94
      %p100 = scmp.eq.s32.totalorder %s13, 0
      %p101 = por %p99, %p100
      %p102 = scmp.ne.s32.totalorder %s91, %s94
      %p103 = scmp.eq.s32.totalorder %s18, 1
      %p104 = por %p102, %p103
      %p105 = scmp.ne.s32.totalorder %s94, %s95
      %p106 = scmp.eq.s32.totalorder %s18, 0
      %p107 = por %p105, %p106
      %p108 = scmp.ne.s32.totalorder %s94, %s95
      %p109 = scmp.eq.s32.totalorder %s19, 1
      %p110 = por %p108, %p109
      %p112 = scmp.ne.s32.totalorder %s95, %s111
      %p113 = scmp.eq.s32.totalorder %s19, 0
      %p114 = por %p112, %p113
      %s115 = ssub.s32 1, %s20
      %s116 = ssub.s32 1, %s32
      %s117 = ssub.s32 %s115, %s116
      %s118 = ssub.s32 %s21, %s28
      %s119 = sor.u32 %s117, %s118
      %p120 = scmp.eq.s32.totalorder %s119, 0
      %s122 = sadd.s32 %s121, 1
      %s123 = scalar_select %p120, %s121, %s122
      %p126 = pneg %p120
      %p127 = scmp.eq.s32.totalorder %s13, 1
      %p128 = por %p126, %p127
      %p129 = scmp.ne.s32.totalorder %s121, %s124
      %p130 = scmp.eq.s32.totalorder %s13, 0
      %p131 = por %p129, %p130
      %p132 = scmp.ne.s32.totalorder %s121, %s124
      %p133 = scmp.eq.s32.totalorder %s18, 1
      %p134 = por %p132, %p133
      %p135 = scmp.ne.s32.totalorder %s124, %s125
      %p136 = scmp.eq.s32.totalorder %s18, 0
      %p137 = por %p135, %p136
      %p138 = scmp.ne.s32.totalorder %s124, %s125
      %p139 = scmp.eq.s32.totalorder %s19, 1
      %p140 = por %p138, %p139
      %p142 = scmp.ne.s32.totalorder %s125, %s141
      %p143 = scmp.eq.s32.totalorder %s19, 0
      %p144 = por %p142, %p143
      %s145 = ssub.s32 %s20, %s32
      %s146 = ssub.s32 %s21, %s28
      %s147 = sor.u32 %s145, %s146
      %p148 = scmp.eq.s32.totalorder %s147, 0
      %s150 = sadd.s32 %s149, 1
      %s151 = scalar_select %p148, %s149, %s150
      %p154 = pneg %p148
      %p155 = scmp.eq.s32.totalorder %s13, 1
      %p156 = por %p154, %p155
      %p157 = scmp.ne.s32.totalorder %s149, %s152
      %p158 = scmp.eq.s32.totalorder %s13, 0
      %p159 = por %p157, %p158
      %p160 = scmp.ne.s32.totalorder %s149, %s152
      %p161 = scmp.eq.s32.totalorder %s18, 1
      %p162 = por %p160, %p161
      %p163 = scmp.ne.s32.totalorder %s152, %s153
      %p164 = scmp.eq.s32.totalorder %s18, 0
      %p165 = por %p163, %p164
      %p166 = scmp.ne.s32.totalorder %s152, %s153
      %p167 = scmp.eq.s32.totalorder %s19, 1
      %p168 = por %p166, %p167
      %p170 = scmp.ne.s32.totalorder %s153, %s169
      %p171 = scmp.eq.s32.totalorder %s19, 0
      %p172 = por %p170, %p171
      %p173 = scmp.le.s32.totalorder 1, %s13
      %p174 = scmp.lt.s32.totalorder %s13, 3
      %p175 = pnand %p173, %p174
      %p176 = pneg %p175
      // Predicated region
      $region9: #{tpu_custom_call.1} parent=5 // pred_check
        _
      $region10: #{tpu_custom_call.1} parent=5 // pred_check_branch
        %178 = sbr.rel (%p175) target = $region12
      $region11: #{tpu_custom_call.1} parent=5 // pred_region
        %s179 = ssub.s32 %s13, 1
      $region12: #{tpu_custom_call.1} parent=5 // pred_fallthru
        _
      %p180 = scmp.lt.s32.totalorder %s13, 2
      // Predicated region
      $region13: #{tpu_custom_call.1} parent=5 // pred_check
        %p181 = pneg %p180
      $region14: #{tpu_custom_call.1} parent=5 // pred_check_branch
        %183 = sbr.rel (%p181) target = $region16
      $region15: #{tpu_custom_call.1} parent=5 // pred_region
        // Predicated region
        $region17: #{tpu_custom_call.1} parent=15 // pred_check
          %p184 = pneg %p45
        $region18: #{tpu_custom_call.1} parent=15 // pred_check_branch
          %186 = sbr.rel (%p184) target = $region20
        $region19: #{tpu_custom_call.1} parent=15 // pred_region
          %p187 = scmp.lt.s32.totalorder %s20, 1
          %s188 = scalar_select %p187, %s20, 1
          %s189 = smul.addr %s188, 4
          %s190 = smul.addr %s189, 8
          %s191 = scalar_lea.vmem %s0, %s190
        $region20: #{tpu_custom_call.1} parent=15 // pred_fallthru
          _
        // Predicated region
        $region21: #{tpu_custom_call.1} parent=15 // pred_check
          %p192 = pneg %p73
        $region22: #{tpu_custom_call.1} parent=15 // pred_check_branch
          %194 = sbr.rel (%p192) target = $region24
        $region23: #{tpu_custom_call.1} parent=15 // pred_region
          %s195 = ssub.s32 1, %s20
          %p196 = scmp.lt.s32.totalorder %s195, 1
          %s197 = scalar_select %p196, %s195, 1
          %s198 = smul.addr %s197, 4
          %s199 = smul.addr %s198, 8
          %s200 = scalar_lea.vmem %s1, %s199
          %s201 = ssub.s32 1, %s20
        $region24: #{tpu_custom_call.1} parent=15 // pred_fallthru
          _
        // Predicated region
        $region25: #{tpu_custom_call.1} parent=15 // pred_check
          %p202 = pneg %p101
        $region26: #{tpu_custom_call.1} parent=15 // pred_check_branch
          %204 = sbr.rel (%p202) target = $region28
        $region27: #{tpu_custom_call.1} parent=15 // pred_region
          %p205 = scmp.lt.s32.totalorder %s20, 1
          %s206 = scalar_select %p205, %s20, 1
          %p207 = scmp.lt.s32.totalorder %s21, 0
          %s208 = scalar_select %p207, %s21, 0
          %s209 = sadd.s32 %s208, %s206
          %s210 = smul.addr %s209, 4
          %s211 = scalar_lea.vmem %s2, %s210
        $region28: #{tpu_custom_call.1} parent=15 // pred_fallthru
          _
        // Predicated region
        $region29: #{tpu_custom_call.1} parent=15 // pred_check
          %p212 = pneg %p131
        $region30: #{tpu_custom_call.1} parent=15 // pred_check_branch
          %214 = sbr.rel (%p212) target = $region32
        $region31: #{tpu_custom_call.1} parent=15 // pred_region
          %s215 = ssub.s32 1, %s20
          %p216 = scmp.lt.s32.totalorder %s215, 1
          %s217 = scalar_select %p216, %s215, 1
          %p218 = scmp.lt.s32.totalorder %s21, 0
          %s219 = scalar_select %p218, %s21, 0
          %s220 = sadd.s32 %s219, %s217
          %s221 = smul.addr %s220, 4
          %s222 = scalar_lea.vmem %s3, %s221
          %s223 = ssub.s32 1, %s20
        $region32: #{tpu_custom_call.1} parent=15 // pred_fallthru
          _
      $region16: #{tpu_custom_call.1} parent=5 // pred_fallthru
        _
      %p224 = scmp.le.s32.totalorder 1, %s13
      %p225 = scmp.lt.s32.totalorder %s13, 3
      %p226 = pnand %p224, %p225
      %p227 = pneg %p226
      // Predicated region
      $region33: #{tpu_custom_call.1} parent=5 // pred_check
        _
      $region34: #{tpu_custom_call.1} parent=5 // pred_check_branch
        %229 = sbr.rel (%p226) target = $region36
      $region35: #{tpu_custom_call.1} parent=5 // pred_region
        %s230 = ssub.s32 %s13, 1
        %p231 = scmp.lt.s32.totalorder %s22, 1
        %s232 = scalar_select %p231, %s22, 1
        %s233 = smul.addr %s232, 4
        %s234 = smul.addr %s233, 8
        %s235 = scalar_lea.vmem %s0, %s234
        %p236 = pneg %p51
        %p237 = pneg %p48
        %s238 = ssub.s32 1, %s22
        %p239 = scmp.lt.s32.totalorder %s238, 1
        %s240 = scalar_select %p239, %s238, 1
        %s241 = smul.addr %s240, 4
        %s242 = smul.addr %s241, 8
        %s243 = scalar_lea.vmem %s1, %s242
        %p244 = pneg %p79
        %p245 = pneg %p76
        %p246 = scmp.lt.s32.totalorder %s22, 1
        %s247 = scalar_select %p246, %s22, 1
        %p248 = scmp.lt.s32.totalorder %s23, 0
        %s249 = scalar_select %p248, %s23, 0
        %s250 = sadd.s32 %s249, %s247
        %s251 = smul.addr %s250, 4
        %s252 = scalar_lea.vmem %s2, %s251
        %p253 = pneg %p107
        %p254 = pneg %p104
        %s255 = ssub.s32 1, %s22
        %p256 = scmp.lt.s32.totalorder %s255, 1
        %s257 = scalar_select %p256, %s255, 1
        %p258 = scmp.lt.s32.totalorder %s23, 0
        %s259 = scalar_select %p258, %s23, 0
        %s260 = sadd.s32 %s259, %s257
        %s261 = smul.addr %s260, 4
        %s262 = scalar_lea.vmem %s3, %s261
        %p263 = pneg %p137
        %p264 = pneg %p134
        %p265 = pneg %p165
        %p266 = pneg %p162
        %s267 = sand.u32 %s152, 1
        %s268 = scalar_lea.sflag [#allocation3], %s267
        %s269 = sand.u32 %s152, 1
        %s270 = smul.addr %s269, 8
        %s271 = scalar_lea.vmem [#allocation2], %s270
        %p272 = scmp.lt.s32.totalorder %s22, 1
        %s273 = scalar_select %p272, %s22, 1
        %s274 = smul.addr %s273, 4
        %s275 = smul.addr %s274, 8
        %s276 = scalar_lea.vmem %s0, %s275
        %s277 = ssub.s32 1, %s22
        %p278 = scmp.lt.s32.totalorder %s277, 1
        %s279 = scalar_select %p278, %s277, 1
        %s280 = smul.addr %s279, 4
        %s281 = smul.addr %s280, 8
        %s282 = scalar_lea.vmem %s1, %s281
        %s283 = ssub.s32 1, %s22
        %p284 = scmp.lt.s32.totalorder %s22, 1
        %s285 = scalar_select %p284, %s22, 1
        %p286 = scmp.lt.s32.totalorder %s23, 0
        %s287 = scalar_select %p286, %s23, 0
        %s288 = sadd.s32 %s287, %s285
        %s289 = smul.addr %s288, 4
        %s290 = scalar_lea.vmem %s2, %s289
        %s291 = ssub.s32 1, %s22
        %p292 = scmp.lt.s32.totalorder %s291, 1
        %s293 = scalar_select %p292, %s291, 1
        %p294 = scmp.lt.s32.totalorder %s23, 0
        %s295 = scalar_select %p294, %s23, 0
        %s296 = sadd.s32 %s295, %s293
        %s297 = smul.addr %s296, 4
        %s298 = scalar_lea.vmem %s3, %s297
        %s299 = ssub.s32 1, %s22
        %v300 = vld [vmem:[%s276] sm:$0xff]
        %v301 = vld [vmem:[%s276 + $0x8] sm:$0xff]
        %v302 = vld [vmem:[%s276 + $0x10] sm:$0xff]
        %v303 = vld [vmem:[%s276 + $0x18] sm:$0xff]
        %v304 = vld [vmem:[%s282] sm:$0xff]
        %v305 = vld [vmem:[%s282 + $0x8] sm:$0xff]
        %v306 = vld [vmem:[%s282 + $0x10] sm:$0xff]
        %v307 = vld [vmem:[%s282 + $0x18] sm:$0xff]
        %v308 = vld [vmem:[%s290] sm:$0xf]
        %v309 = vmul.f32 %v308, 10.0
        %v310 = vld [vmem:[%s298] sm:$0xf]
        %vm311 = vcmask 261120
        %v313 = vsel %vm311, %v309, 0
        %315 = vmatprep.subr.mxu0 0.0
        %v316 = vand.u32 %v304, 4294901760
        %317 = vmatpush1.msra.mxu0 %v316
        %318 = vmatprep.subr.mxu0 0.0
        %v319 = vand.u32 %v305, 4294901760
        %320 = vmatpush1.msra.mxu0 %v319
        %321 = vmatprep.subr.mxu0 0.0
        %v322 = vand.u32 %v306, 4294901760
        %323 = vmatpush1.msra.mxu0 %v322
        %324 = vmatprep.subr.mxu0 0.0
        %v325 = vand.u32 %v307, 4294901760
        %326 = vmatpush1.msra.mxu0 %v325
        %327 = vmatprep.subr.mxu0 0.0
        %328 = vmatpush1.msra.mxu0 0.0
        %329 = vmatprep.subr.mxu0 0.0
        %330 = vmatpush1.msra.mxu0 0.0
        %331 = vmatprep.subr.mxu0 0.0
        %332 = vmatpush1.msra.mxu0 0.0
        %333 = vmatprep.subr.mxu0 0.0
        %334 = vmatpush1.msra.mxu0 0.0
        %335 = vmatprep.subr.mxu0 0.0
        %336 = vmatpush1.msra.mxu0 0.0
        %337 = vmatprep.subr.mxu0 0.0
        %338 = vmatpush1.msra.mxu0 0.0
        %339 = vmatprep.subr.mxu0 0.0
        %340 = vmatpush1.msra.mxu0 0.0
        %341 = vmatprep.subr.mxu0 0.0
        %342 = vmatpush1.msra.mxu0 0.0
        %343 = vmatprep.subr.mxu0 0.0
        %344 = vmatpush1.msra.mxu0 0.0
        %345 = vmatprep.subr.mxu0 0.0
        %346 = vmatpush1.msra.mxu0 0.0
        %347 = vmatprep.subr.mxu0 0.0
        %348 = vmatpush1.msra.mxu0 0.0
        %349 = vmatprep.subr.mxu0 0.0
        %350 = vmatpush1.msra.mxu0 0.0
        %351 = vmatprep.subr.mxu0 0.0
        %352 = vmatpush1.msra.mxu0 0.0
        %353 = vmatprep.subr.mxu0 0.0
        %354 = vmatpush1.msra.mxu0 0.0
        %355 = vmatprep.subr.mxu0 0.0
        %356 = vmatpush1.msra.mxu0 0.0
        %357 = vmatprep.subr.mxu0 0.0
        %358 = vmatpush1.msra.mxu0 0.0
        %359 = vmatprep.subr.mxu0 0.0
        %360 = vmatpush1.msra.mxu0 0.0
        %361 = vmatprep.subr.mxu0 0.0
        %362 = vmatpush1.msra.mxu0 0.0
        %363 = vmatprep.subr.mxu0 0.0
        %364 = vmatpush1.msra.mxu0 0.0
        %365 = vmatprep.subr.mxu0 0.0
        %366 = vmatpush1.msra.mxu0 0.0
        %367 = vmatprep.subr.mxu0 0.0
        %368 = vmatpush1.msra.mxu0 0.0
        %369 = vmatprep.subr.mxu0 0.0
        %370 = vmatpush1.msra.mxu0 0.0
        %371 = vmatprep.subr.mxu0 0.0
        %372 = vmatpush1.msra.mxu0 0.0
        %373 = vmatprep.subr.mxu0 0.0
        %374 = vmatpush1.msra.mxu0 0.0
        %375 = vmatprep.subr.mxu0 0.0
        %376 = vmatpush1.msra.mxu0 0.0
        %377 = vmatprep.subr.mxu0 0.0
        %378 = vmatpush1.msra.mxu0 0.0
        %379 = vmatprep.subr.mxu0 0.0
        %380 = vmatpush1.msra.mxu0 0.0
        %381 = vmatprep.subr.mxu0 0.0
        %382 = vmatpush1.msra.mxu0 0.0
        %383 = vmatprep.mubr.f32.mxu0 0.0
        %v384 = vand.u32 %v313, 4294901760
        %v385 = vsub.f32 %v313, %v384
        %v386 = vand.u32 %v385, 4294901760
        %v387 = vsub.f32 %v385, %v386
        %v388 = vand.u32 %v387, 4294901760
        %389 = vmatmul.mubr.f32.gmra.mrb[0].mxu0 %v388
        %v390 = vpop.f32.mrb[0].mxu0
        %v391 = vadd.f32 0.0, %v390
        %v392 = vpop.f32.mrb[0].mxu0
        %393 = vdwg.mxu0
        %394 = vmatprep.subr.mxu0 0.0
        %v395 = vand.u32 %v304, 4294901760
        %v396 = vsub.f32 %v304, %v395
        %v397 = vand.u32 %v396, 4294901760
        %v398 = vsub.f32 %v396, %v397
        %v399 = vand.u32 %v398, 4294901760
        %400 = vmatpush1.msra.mxu0 %v399
        %401 = vmatprep.subr.mxu0 0.0
        %v402 = vand.u32 %v305, 4294901760
        %v403 = vsub.f32 %v305, %v402
        %v404 = vand.u32 %v403, 4294901760
        %v405 = vsub.f32 %v403, %v404
        %v406 = vand.u32 %v405, 4294901760
        %407 = vmatpush1.msra.mxu0 %v406
        %408 = vmatprep.subr.mxu0 0.0
        %v409 = vand.u32 %v306, 4294901760
        %v410 = vsub.f32 %v306, %v409
        %v411 = vand.u32 %v410, 4294901760
        %v412 = vsub.f32 %v410, %v411
        %v413 = vand.u32 %v412, 4294901760
        %414 = vmatpush1.msra.mxu0 %v413
        %415 = vmatprep.subr.mxu0 0.0
        %v416 = vand.u32 %v307, 4294901760
        %v417 = vsub.f32 %v307, %v416
        %v418 = vand.u32 %v417, 4294901760
        %v419 = vsub.f32 %v417, %v418
        %v420 = vand.u32 %v419, 4294901760
        %421 = vmatpush1.msra.mxu0 %v420
        %422 = vmatprep.subr.mxu0 0.0
        %423 = vmatpush1.msra.mxu0 0.0
        %424 = vmatprep.subr.mxu0 0.0
        %425 = vmatpush1.msra.mxu0 0.0
        %426 = vmatprep.subr.mxu0 0.0
        %427 = vmatpush1.msra.mxu0 0.0
        %428 = vmatprep.subr.mxu0 0.0
        %429 = vmatpush1.msra.mxu0 0.0
        %430 = vmatprep.subr.mxu0 0.0
        %431 = vmatpush1.msra.mxu0 0.0
        %432 = vmatprep.subr.mxu0 0.0
        %433 = vmatpush1.msra.mxu0 0.0
        %434 = vmatprep.subr.mxu0 0.0
        %435 = vmatpush1.msra.mxu0 0.0
        %436 = vmatprep.subr.mxu0 0.0
        %437 = vmatpush1.msra.mxu0 0.0
        %438 = vmatprep.subr.mxu0 0.0
        %439 = vmatpush1.msra.mxu0 0.0
        %440 = vmatprep.subr.mxu0 0.0
        %441 = vmatpush1.msra.mxu0 0.0
        %442 = vmatprep.subr.mxu0 0.0
        %443 = vmatpush1.msra.mxu0 0.0
        %444 = vmatprep.subr.mxu0 0.0
        %445 = vmatpush1.msra.mxu0 0.0
        %446 = vmatprep.subr.mxu0 0.0
        %447 = vmatpush1.msra.mxu0 0.0
        %448 = vmatprep.subr.mxu0 0.0
        %449 = vmatpush1.msra.mxu0 0.0
        %450 = vmatprep.subr.mxu0 0.0
        %451 = vmatpush1.msra.mxu0 0.0
        %452 = vmatprep.subr.mxu0 0.0
        %453 = vmatpush1.msra.mxu0 0.0
        %454 = vmatprep.subr.mxu0 0.0
        %455 = vmatpush1.msra.mxu0 0.0
        %456 = vmatprep.subr.mxu0 0.0
        %457 = vmatpush1.msra.mxu0 0.0
        %458 = vmatprep.subr.mxu0 0.0
        %459 = vmatpush1.msra.mxu0 0.0
        %460 = vmatprep.subr.mxu0 0.0
        %461 = vmatpush1.msra.mxu0 0.0
        %462 = vmatprep.subr.mxu0 0.0
        %463 = vmatpush1.msra.mxu0 0.0
        %464 = vmatprep.subr.mxu0 0.0
        %465 = vmatpush1.msra.mxu0 0.0
        %466 = vmatprep.subr.mxu0 0.0
        %467 = vmatpush1.msra.mxu0 0.0
        %468 = vmatprep.subr.mxu0 0.0
        %469 = vmatpush1.msra.mxu0 0.0
        %470 = vmatprep.subr.mxu0 0.0
        %471 = vmatpush1.msra.mxu0 0.0
        %472 = vmatprep.subr.mxu0 0.0
        %473 = vmatpush1.msra.mxu0 0.0
        %474 = vmatprep.subr.mxu0 0.0
        %475 = vmatpush1.msra.mxu0 0.0
        %476 = vmatprep.subr.mxu0 0.0
        %477 = vmatpush1.msra.mxu0 0.0
        %478 = vmatprep.mubr.f32.mxu0 0.0
        %v479 = vand.u32 %v313, 4294901760
        %480 = vmatmul.mubr.f32.gmra.mrb[0].mxu0 %v479
        %v481 = vpop.f32.mrb[0].mxu0
        %v482 = vadd.f32 %v391, %v481
        %v483 = vpop.f32.mrb[0].mxu0
        %484 = vdwg.mxu0
        %485 = vmatprep.subr.mxu0 0.0
        %v486 = vand.u32 %v304, 4294901760
        %v487 = vsub.f32 %v304, %v486
        %488 = vmatpush1.msra.mxu0 %v487
        %489 = vmatprep.subr.mxu0 0.0
        %v490 = vand.u32 %v305, 4294901760
        %v491 = vsub.f32 %v305, %v490
        %492 = vmatpush1.msra.mxu0 %v491
        %493 = vmatprep.subr.mxu0 0.0
        %v494 = vand.u32 %v306, 4294901760
        %v495 = vsub.f32 %v306, %v494
        %496 = vmatpush1.msra.mxu0 %v495
        %497 = vmatprep.subr.mxu0 0.0
        %v498 = vand.u32 %v307, 4294901760
        %v499 = vsub.f32 %v307, %v498
        %500 = vmatpush1.msra.mxu0 %v499
        %501 = vmatprep.subr.mxu0 0.0
        %502 = vmatpush1.msra.mxu0 0.0
        %503 = vmatprep.subr.mxu0 0.0
        %504 = vmatpush1.msra.mxu0 0.0
        %505 = vmatprep.subr.mxu0 0.0
        %506 = vmatpush1.msra.mxu0 0.0
        %507 = vmatprep.subr.mxu0 0.0
        %508 = vmatpush1.msra.mxu0 0.0
        %509 = vmatprep.subr.mxu0 0.0
        %510 = vmatpush1.msra.mxu0 0.0
        %511 = vmatprep.subr.mxu0 0.0
        %512 = vmatpush1.msra.mxu0 0.0
        %513 = vmatprep.subr.mxu0 0.0
        %514 = vmatpush1.msra.mxu0 0.0
        %515 = vmatprep.subr.mxu0 0.0
        %516 = vmatpush1.msra.mxu0 0.0
        %517 = vmatprep.subr.mxu0 0.0
        %518 = vmatpush1.msra.mxu0 0.0
        %519 = vmatprep.subr.mxu0 0.0
        %520 = vmatpush1.msra.mxu0 0.0
        %521 = vmatprep.subr.mxu0 0.0
        %522 = vmatpush1.msra.mxu0 0.0
        %523 = vmatprep.subr.mxu0 0.0
        %524 = vmatpush1.msra.mxu0 0.0
        %525 = vmatprep.subr.mxu0 0.0
        %526 = vmatpush1.msra.mxu0 0.0
        %527 = vmatprep.subr.mxu0 0.0
        %528 = vmatpush1.msra.mxu0 0.0
        %529 = vmatprep.subr.mxu0 0.0
        %530 = vmatpush1.msra.mxu0 0.0
        %531 = vmatprep.subr.mxu0 0.0
        %532 = vmatpush1.msra.mxu0 0.0
        %533 = vmatprep.subr.mxu0 0.0
        %534 = vmatpush1.msra.mxu0 0.0
        %535 = vmatprep.subr.mxu0 0.0
        %536 = vmatpush1.msra.mxu0 0.0
        %537 = vmatprep.subr.mxu0 0.0
        %538 = vmatpush1.msra.mxu0 0.0
        %539 = vmatprep.subr.mxu0 0.0
        %540 = vmatpush1.msra.mxu0 0.0
        %541 = vmatprep.subr.mxu0 0.0
        %542 = vmatpush1.msra.mxu0 0.0
        %543 = vmatprep.subr.mxu0 0.0
        %544 = vmatpush1.msra.mxu0 0.0
        %545 = vmatprep.subr.mxu0 0.0
        %546 = vmatpush1.msra.mxu0 0.0
        %547 = vmatprep.subr.mxu0 0.0
        %548 = vmatpush1.msra.mxu0 0.0
        %549 = vmatprep.subr.mxu0 0.0
        %550 = vmatpush1.msra.mxu0 0.0
        %551 = vmatprep.subr.mxu0 0.0
        %552 = vmatpush1.msra.mxu0 0.0
        %553 = vmatprep.subr.mxu0 0.0
        %554 = vmatpush1.msra.mxu0 0.0
        %555 = vmatprep.subr.mxu0 0.0
        %556 = vmatpush1.msra.mxu0 0.0
        %557 = vmatprep.mubr.f32.mxu0 0.0
        %v558 = vand.u32 %v313, 4294901760
        %v559 = vsub.f32 %v313, %v558
        %560 = vmatmul.mubr.f32.gmra.mrb[0].mxu0 %v559
        %v561 = vpop.f32.mrb[0].mxu0
        %v562 = vadd.f32 %v482, %v561
        %v563 = vpop.f32.mrb[0].mxu0
        %564 = vdwg.mxu0
        %565 = vmatprep.subr.mxu0 0.0
        %v566 = vand.u32 %v304, 4294901760
        %567 = vmatpush1.msra.mxu0 %v566
        %568 = vmatprep.subr.mxu0 0.0
        %v569 = vand.u32 %v305, 4294901760
        %570 = vmatpush1.msra.mxu0 %v569
        %571 = vmatprep.subr.mxu0 0.0
        %v572 = vand.u32 %v306, 4294901760
        %573 = vmatpush1.msra.mxu0 %v572
        %574 = vmatprep.subr.mxu0 0.0
        %v575 = vand.u32 %v307, 4294901760
        %576 = vmatpush1.msra.mxu0 %v575
        %577 = vmatprep.subr.mxu0 0.0
        %578 = vmatpush1.msra.mxu0 0.0
        %579 = vmatprep.subr.mxu0 0.0
        %580 = vmatpush1.msra.mxu0 0.0
        %581 = vmatprep.subr.mxu0 0.0
        %582 = vmatpush1.msra.mxu0 0.0
        %583 = vmatprep.subr.mxu0 0.0
        %584 = vmatpush1.msra.mxu0 0.0
        %585 = vmatprep.subr.mxu0 0.0
        %586 = vmatpush1.msra.mxu0 0.0
        %587 = vmatprep.subr.mxu0 0.0
        %588 = vmatpush1.msra.mxu0 0.0
        %589 = vmatprep.subr.mxu0 0.0
        %590 = vmatpush1.msra.mxu0 0.0
        %591 = vmatprep.subr.mxu0 0.0
        %592 = vmatpush1.msra.mxu0 0.0
        %593 = vmatprep.subr.mxu0 0.0
        %594 = vmatpush1.msra.mxu0 0.0
        %595 = vmatprep.subr.mxu0 0.0
        %596 = vmatpush1.msra.mxu0 0.0
        %597 = vmatprep.subr.mxu0 0.0
        %598 = vmatpush1.msra.mxu0 0.0
        %599 = vmatprep.subr.mxu0 0.0
        %600 = vmatpush1.msra.mxu0 0.0
        %601 = vmatprep.subr.mxu0 0.0
        %602 = vmatpush1.msra.mxu0 0.0
        %603 = vmatprep.subr.mxu0 0.0
        %604 = vmatpush1.msra.mxu0 0.0
        %605 = vmatprep.subr.mxu0 0.0
        %606 = vmatpush1.msra.mxu0 0.0
        %607 = vmatprep.subr.mxu0 0.0
        %608 = vmatpush1.msra.mxu0 0.0
        %609 = vmatprep.subr.mxu0 0.0
        %610 = vmatpush1.msra.mxu0 0.0
        %611 = vmatprep.subr.mxu0 0.0
        %612 = vmatpush1.msra.mxu0 0.0
        %613 = vmatprep.subr.mxu0 0.0
        %614 = vmatpush1.msra.mxu0 0.0
        %615 = vmatprep.subr.mxu0 0.0
        %616 = vmatpush1.msra.mxu0 0.0
        %617 = vmatprep.subr.mxu0 0.0
        %618 = vmatpush1.msra.mxu0 0.0
        %619 = vmatprep.subr.mxu0 0.0
        %620 = vmatpush1.msra.mxu0 0.0
        %621 = vmatprep.subr.mxu0 0.0
        %622 = vmatpush1.msra.mxu0 0.0
        %623 = vmatprep.subr.mxu0 0.0
        %624 = vmatpush1.msra.mxu0 0.0
        %625 = vmatprep.subr.mxu0 0.0
        %626 = vmatpush1.msra.mxu0 0.0
        %627 = vmatprep.subr.mxu0 0.0
        %628 = vmatpush1.msra.mxu0 0.0
        %629 = vmatprep.subr.mxu0 0.0
        %630 = vmatpush1.msra.mxu0 0.0
        %631 = vmatprep.subr.mxu0 0.0
        %632 = vmatpush1.msra.mxu0 0.0
        %633 = vmatprep.mubr.f32.mxu0 0.0
        %v634 = vand.u32 %v313, 4294901760
        %v635 = vsub.f32 %v313, %v634
        %v636 = vand.u32 %v635, 4294901760
        %637 = vmatmul.mubr.f32.gmra.mrb[0].mxu0 %v636
        %v638 = vpop.f32.mrb[0].mxu0
        %v639 = vadd.f32 %v562, %v638
        %v640 = vpop.f32.mrb[0].mxu0
        %641 = vdwg.mxu0
        %642 = vmatprep.subr.mxu0 0.0
        %v643 = vand.u32 %v304, 4294901760
        %v644 = vsub.f32 %v304, %v643
        %v645 = vand.u32 %v644, 4294901760
        %646 = vmatpush1.msra.mxu0 %v645
        %647 = vmatprep.subr.mxu0 0.0
        %v648 = vand.u32 %v305, 4294901760
        %v649 = vsub.f32 %v305, %v648
        %v650 = vand.u32 %v649, 4294901760
        %651 = vmatpush1.msra.mxu0 %v650
        %652 = vmatprep.subr.mxu0 0.0
        %v653 = vand.u32 %v306, 4294901760
        %v654 = vsub.f32 %v306, %v653
        %v655 = vand.u32 %v654, 4294901760
        %656 = vmatpush1.msra.mxu0 %v655
        %657 = vmatprep.subr.mxu0 0.0
        %v658 = vand.u32 %v307, 4294901760
        %v659 = vsub.f32 %v307, %v658
        %v660 = vand.u32 %v659, 4294901760
        %661 = vmatpush1.msra.mxu0 %v660
        %662 = vmatprep.subr.mxu0 0.0
        %663 = vmatpush1.msra.mxu0 0.0
        %664 = vmatprep.subr.mxu0 0.0
        %665 = vmatpush1.msra.mxu0 0.0
        %666 = vmatprep.subr.mxu0 0.0
        %667 = vmatpush1.msra.mxu0 0.0
        %668 = vmatprep.subr.mxu0 0.0
        %669 = vmatpush1.msra.mxu0 0.0
        %670 = vmatprep.subr.mxu0 0.0
        %671 = vmatpush1.msra.mxu0 0.0
        %672 = vmatprep.subr.mxu0 0.0
        %673 = vmatpush1.msra.mxu0 0.0
        %674 = vmatprep.subr.mxu0 0.0
        %675 = vmatpush1.msra.mxu0 0.0
        %676 = vmatprep.subr.mxu0 0.0
        %677 = vmatpush1.msra.mxu0 0.0
        %678 = vmatprep.subr.mxu0 0.0
        %679 = vmatpush1.msra.mxu0 0.0
        %680 = vmatprep.subr.mxu0 0.0
        %681 = vmatpush1.msra.mxu0 0.0
        %682 = vmatprep.subr.mxu0 0.0
        %683 = vmatpush1.msra.mxu0 0.0
        %684 = vmatprep.subr.mxu0 0.0
        %685 = vmatpush1.msra.mxu0 0.0
        %686 = vmatprep.subr.mxu0 0.0
        %687 = vmatpush1.msra.mxu0 0.0
        %688 = vmatprep.subr.mxu0 0.0
        %689 = vmatpush1.msra.mxu0 0.0
        %690 = vmatprep.subr.mxu0 0.0
        %691 = vmatpush1.msra.mxu0 0.0
        %692 = vmatprep.subr.mxu0 0.0
        %693 = vmatpush1.msra.mxu0 0.0
        %694 = vmatprep.subr.mxu0 0.0
        %695 = vmatpush1.msra.mxu0 0.0
        %696 = vmatprep.subr.mxu0 0.0
        %697 = vmatpush1.msra.mxu0 0.0
        %698 = vmatprep.subr.mxu0 0.0
        %699 = vmatpush1.msra.mxu0 0.0
        %700 = vmatprep.subr.mxu0 0.0
        %701 = vmatpush1.msra.mxu0 0.0
        %702 = vmatprep.subr.mxu0 0.0
        %703 = vmatpush1.msra.mxu0 0.0
        %704 = vmatprep.subr.mxu0 0.0
        %705 = vmatpush1.msra.mxu0 0.0
        %706 = vmatprep.subr.mxu0 0.0
        %707 = vmatpush1.msra.mxu0 0.0
        %708 = vmatprep.subr.mxu0 0.0
        %709 = vmatpush1.msra.mxu0 0.0
        %710 = vmatprep.subr.mxu0 0.0
        %711 = vmatpush1.msra.mxu0 0.0
        %712 = vmatprep.subr.mxu0 0.0
        %713 = vmatpush1.msra.mxu0 0.0
        %714 = vmatprep.subr.mxu0 0.0
        %715 = vmatpush1.msra.mxu0 0.0
        %716 = vmatprep.subr.mxu0 0.0
        %717 = vmatpush1.msra.mxu0 0.0
        %718 = vmatprep.mubr.f32.mxu0 0.0
        %v719 = vand.u32 %v313, 4294901760
        %720 = vmatmul.mubr.f32.gmra.mrb[0].mxu0 %v719
        %v721 = vpop.f32.mrb[0].mxu0
        %v722 = vadd.f32 %v639, %v721
        %v723 = vpop.f32.mrb[0].mxu0
        %724 = vdwg.mxu0
        %725 = vmatprep.subr.mxu0 0.0
        %v726 = vand.u32 %v304, 4294901760
        %727 = vmatpush1.msra.mxu0 %v726
        %728 = vmatprep.subr.mxu0 0.0
        %v729 = vand.u32 %v305, 4294901760
        %730 = vmatpush1.msra.mxu0 %v729
        %731 = vmatprep.subr.mxu0 0.0
        %v732 = vand.u32 %v306, 4294901760
        %733 = vmatpush1.msra.mxu0 %v732
        %734 = vmatprep.subr.mxu0 0.0
        %v735 = vand.u32 %v307, 4294901760
        %736 = vmatpush1.msra.mxu0 %v735
        %737 = vmatprep.subr.mxu0 0.0
        %738 = vmatpush1.msra.mxu0 0.0
        %739 = vmatprep.subr.mxu0 0.0
        %740 = vmatpush1.msra.mxu0 0.0
        %741 = vmatprep.subr.mxu0 0.0
        %742 = vmatpush1.msra.mxu0 0.0
        %743 = vmatprep.subr.mxu0 0.0
        %744 = vmatpush1.msra.mxu0 0.0
        %745 = vmatprep.subr.mxu0 0.0
        %746 = vmatpush1.msra.mxu0 0.0
        %747 = vmatprep.subr.mxu0 0.0
        %748 = vmatpush1.msra.mxu0 0.0
        %749 = vmatprep.subr.mxu0 0.0
        %750 = vmatpush1.msra.mxu0 0.0
        %751 = vmatprep.subr.mxu0 0.0
        %752 = vmatpush1.msra.mxu0 0.0
        %753 = vmatprep.subr.mxu0 0.0
        %754 = vmatpush1.msra.mxu0 0.0
        %755 = vmatprep.subr.mxu0 0.0
        %756 = vmatpush1.msra.mxu0 0.0
        %757 = vmatprep.subr.mxu0 0.0
        %758 = vmatpush1.msra.mxu0 0.0
        %759 = vmatprep.subr.mxu0 0.0
        %760 = vmatpush1.msra.mxu0 0.0
        %761 = vmatprep.subr.mxu0 0.0
        %762 = vmatpush1.msra.mxu0 0.0
        %763 = vmatprep.subr.mxu0 0.0
        %764 = vmatpush1.msra.mxu0 0.0
        %765 = vmatprep.subr.mxu0 0.0
        %766 = vmatpush1.msra.mxu0 0.0
        %767 = vmatprep.subr.mxu0 0.0
        %768 = vmatpush1.msra.mxu0 0.0
        %769 = vmatprep.subr.mxu0 0.0
        %770 = vmatpush1.msra.mxu0 0.0
        %771 = vmatprep.subr.mxu0 0.0
        %772 = vmatpush1.msra.mxu0 0.0
        %773 = vmatprep.subr.mxu0 0.0
        %774 = vmatpush1.msra.mxu0 0.0
        %775 = vmatprep.subr.mxu0 0.0
        %776 = vmatpush1.msra.mxu0 0.0
        %777 = vmatprep.subr.mxu0 0.0
        %778 = vmatpush1.msra.mxu0 0.0
        %779 = vmatprep.subr.mxu0 0.0
        %780 = vmatpush1.msra.mxu0 0.0
        %781 = vmatprep.subr.mxu0 0.0
        %782 = vmatpush1.msra.mxu0 0.0
        %783 = vmatprep.subr.mxu0 0.0
        %784 = vmatpush1.msra.mxu0 0.0
        %785 = vmatprep.subr.mxu0 0.0
        %786 = vmatpush1.msra.mxu0 0.0
        %787 = vmatprep.subr.mxu0 0.0
        %788 = vmatpush1.msra.mxu0 0.0
        %789 = vmatprep.subr.mxu0 0.0
        %790 = vmatpush1.msra.mxu0 0.0
        %791 = vmatprep.subr.mxu0 0.0
        %792 = vmatpush1.msra.mxu0 0.0
        %793 = vmatprep.mubr.f32.mxu0 0.0
        %v794 = vand.u32 %v313, 4294901760
        %795 = vmatmul.mubr.f32.gmra.mrb[0].mxu0 %v794
        %v796 = vpop.f32.mrb[0].mxu0
        %v797 = vadd.f32 %v722, %v796
        %v798 = vpop.f32.mrb[0].mxu0
        %799 = vdwg.mxu0
        %800 = vmatprep.subr.mxu0 0.0
        %v801 = vand.u32 %v300, 4294901760
        %802 = vmatpush1.msra.mxu0 %v801
        %803 = vmatprep.subr.mxu0 0.0
        %v804 = vand.u32 %v301, 4294901760
        %805 = vmatpush1.msra.mxu0 %v804
        %806 = vmatprep.subr.mxu0 0.0
        %v807 = vand.u32 %v302, 4294901760
        %808 = vmatpush1.msra.mxu0 %v807
        %809 = vmatprep.subr.mxu0 0.0
        %v810 = vand.u32 %v303, 4294901760
        %811 = vmatpush1.msra.mxu0 %v810
        %812 = vmatprep.subr.mxu0 0.0
        %813 = vmatpush1.msra.mxu0 0.0
        %814 = vmatprep.subr.mxu0 0.0
        %815 = vmatpush1.msra.mxu0 0.0
        %816 = vmatprep.subr.mxu0 0.0
        %817 = vmatpush1.msra.mxu0 0.0
        %818 = vmatprep.subr.mxu0 0.0
        %819 = vmatpush1.msra.mxu0 0.0
        %820 = vmatprep.subr.mxu0 0.0
        %821 = vmatpush1.msra.mxu0 0.0
        %822 = vmatprep.subr.mxu0 0.0
        %823 = vmatpush1.msra.mxu0 0.0
        %824 = vmatprep.subr.mxu0 0.0
        %825 = vmatpush1.msra.mxu0 0.0
        %826 = vmatprep.subr.mxu0 0.0
        %827 = vmatpush1.msra.mxu0 0.0
        %828 = vmatprep.subr.mxu0 0.0
        %829 = vmatpush1.msra.mxu0 0.0
        %830 = vmatprep.subr.mxu0 0.0
        %831 = vmatpush1.msra.mxu0 0.0
        %832 = vmatprep.subr.mxu0 0.0
        %833 = vmatpush1.msra.mxu0 0.0
        %834 = vmatprep.subr.mxu0 0.0
        %835 = vmatpush1.msra.mxu0 0.0
        %836 = vmatprep.subr.mxu0 0.0
        %837 = vmatpush1.msra.mxu0 0.0
        %838 = vmatprep.subr.mxu0 0.0
        %839 = vmatpush1.msra.mxu0 0.0
        %840 = vmatprep.subr.mxu0 0.0
        %841 = vmatpush1.msra.mxu0 0.0
        %842 = vmatprep.subr.mxu0 0.0
        %843 = vmatpush1.msra.mxu0 0.0
        %844 = vmatprep.subr.mxu0 0.0
        %845 = vmatpush1.msra.mxu0 0.0
        %846 = vmatprep.subr.mxu0 0.0
        %847 = vmatpush1.msra.mxu0 0.0
        %848 = vmatprep.subr.mxu0 0.0
        %849 = vmatpush1.msra.mxu0 0.0
        %850 = vmatprep.subr.mxu0 0.0
        %851 = vmatpush1.msra.mxu0 0.0
        %852 = vmatprep.subr.mxu0 0.0
        %853 = vmatpush1.msra.mxu0 0.0
        %854 = vmatprep.subr.mxu0 0.0
        %855 = vmatpush1.msra.mxu0 0.0
        %856 = vmatprep.subr.mxu0 0.0
        %857 = vmatpush1.msra.mxu0 0.0
        %858 = vmatprep.subr.mxu0 0.0
        %859 = vmatpush1.msra.mxu0 0.0
        %860 = vmatprep.subr.mxu0 0.0
        %861 = vmatpush1.msra.mxu0 0.0
        %862 = vmatprep.subr.mxu0 0.0
        %863 = vmatpush1.msra.mxu0 0.0
        %864 = vmatprep.subr.mxu0 0.0
        %865 = vmatpush1.msra.mxu0 0.0
        %866 = vmatprep.subr.mxu0 0.0
        %867 = vmatpush1.msra.mxu0 0.0
        %868 = vmatprep.mubr.f32.mxu0 0.0
        %v869 = vand.u32 %v313, 4294901760
        %v870 = vsub.f32 %v313, %v869
        %v871 = vand.u32 %v870, 4294901760
        %v872 = vsub.f32 %v870, %v871
        %v873 = vand.u32 %v872, 4294901760
        %874 = vmatmul.mubr.f32.gmra.mrb[0].mxu0 %v873
        %v875 = vpop.f32.mrb[0].mxu0
        %v876 = vadd.f32 0.0, %v875
        %v877 = vpop.f32.mrb[0].mxu0
        %878 = vdwg.mxu0
        %879 = vmatprep.subr.mxu0 0.0
        %v880 = vand.u32 %v300, 4294901760
        %v881 = vsub.f32 %v300, %v880
        %v882 = vand.u32 %v881, 4294901760
        %v883 = vsub.f32 %v881, %v882
        %v884 = vand.u32 %v883, 4294901760
        %885 = vmatpush1.msra.mxu0 %v884
        %886 = vmatprep.subr.mxu0 0.0
        %v887 = vand.u32 %v301, 4294901760
        %v888 = vsub.f32 %v301, %v887
        %v889 = vand.u32 %v888, 4294901760
        %v890 = vsub.f32 %v888, %v889
        %v891 = vand.u32 %v890, 4294901760
        %892 = vmatpush1.msra.mxu0 %v891
        %893 = vmatprep.subr.mxu0 0.0
        %v894 = vand.u32 %v302, 4294901760
        %v895 = vsub.f32 %v302, %v894
        %v896 = vand.u32 %v895, 4294901760
        %v897 = vsub.f32 %v895, %v896
        %v898 = vand.u32 %v897, 4294901760
        %899 = vmatpush1.msra.mxu0 %v898
        %900 = vmatprep.subr.mxu0 0.0
        %v901 = vand.u32 %v303, 4294901760
        %v902 = vsub.f32 %v303, %v901
        %v903 = vand.u32 %v902, 4294901760
        %v904 = vsub.f32 %v902, %v903
        %v905 = vand.u32 %v904, 4294901760
        %906 = vmatpush1.msra.mxu0 %v905
        %907 = vmatprep.subr.mxu0 0.0
        %908 = vmatpush1.msra.mxu0 0.0
        %909 = vmatprep.subr.mxu0 0.0
        %910 = vmatpush1.msra.mxu0 0.0
        %911 = vmatprep.subr.mxu0 0.0
        %912 = vmatpush1.msra.mxu0 0.0
        %913 = vmatprep.subr.mxu0 0.0
        %914 = vmatpush1.msra.mxu0 0.0
        %915 = vmatprep.subr.mxu0 0.0
        %916 = vmatpush1.msra.mxu0 0.0
        %917 = vmatprep.subr.mxu0 0.0
        %918 = vmatpush1.msra.mxu0 0.0
        %919 = vmatprep.subr.mxu0 0.0
        %920 = vmatpush1.msra.mxu0 0.0
        %921 = vmatprep.subr.mxu0 0.0
        %922 = vmatpush1.msra.mxu0 0.0
        %923 = vmatprep.subr.mxu0 0.0
        %924 = vmatpush1.msra.mxu0 0.0
        %925 = vmatprep.subr.mxu0 0.0
        %926 = vmatpush1.msra.mxu0 0.0
        %927 = vmatprep.subr.mxu0 0.0
        %928 = vmatpush1.msra.mxu0 0.0
        %929 = vmatprep.subr.mxu0 0.0
        %930 = vmatpush1.msra.mxu0 0.0
        %931 = vmatprep.subr.mxu0 0.0
        %932 = vmatpush1.msra.mxu0 0.0
        %933 = vmatprep.subr.mxu0 0.0
        %934 = vmatpush1.msra.mxu0 0.0
        %935 = vmatprep.subr.mxu0 0.0
        %936 = vmatpush1.msra.mxu0 0.0
        %937 = vmatprep.subr.mxu0 0.0
        %938 = vmatpush1.msra.mxu0 0.0
        %939 = vmatprep.subr.mxu0 0.0
        %940 = vmatpush1.msra.mxu0 0.0
        %941 = vmatprep.subr.mxu0 0.0
        %942 = vmatpush1.msra.mxu0 0.0
        %943 = vmatprep.subr.mxu0 0.0
        %944 = vmatpush1.msra.mxu0 0.0
        %945 = vmatprep.subr.mxu0 0.0
        %946 = vmatpush1.msra.mxu0 0.0
        %947 = vmatprep.subr.mxu0 0.0
        %948 = vmatpush1.msra.mxu0 0.0
        %949 = vmatprep.subr.mxu0 0.0
        %950 = vmatpush1.msra.mxu0 0.0
        %951 = vmatprep.subr.mxu0 0.0
        %952 = vmatpush1.msra.mxu0 0.0
        %953 = vmatprep.subr.mxu0 0.0
        %954 = vmatpush1.msra.mxu0 0.0
        %955 = vmatprep.subr.mxu0 0.0
        %956 = vmatpush1.msra.mxu0 0.0
        %957 = vmatprep.subr.mxu0 0.0
        %958 = vmatpush1.msra.mxu0 0.0
        %959 = vmatprep.subr.mxu0 0.0
        %960 = vmatpush1.msra.mxu0 0.0
        %961 = vmatprep.subr.mxu0 0.0
        %962 = vmatpush1.msra.mxu0 0.0
        %963 = vmatprep.mubr.f32.mxu0 0.0
        %v964 = vand.u32 %v313, 4294901760
        %965 = vmatmul.mubr.f32.gmra.mrb[0].mxu0 %v964
        %v966 = vpop.f32.mrb[0].mxu0
        %v967 = vadd.f32 %v876, %v966
        %v968 = vpop.f32.mrb[0].mxu0
        %969 = vdwg.mxu0
        %970 = vmatprep.subr.mxu0 0.0
        %v971 = vand.u32 %v300, 4294901760
        %v972 = vsub.f32 %v300, %v971
        %973 = vmatpush1.msra.mxu0 %v972
        %974 = vmatprep.subr.mxu0 0.0
        %v975 = vand.u32 %v301, 4294901760
        %v976 = vsub.f32 %v301, %v975
        %977 = vmatpush1.msra.mxu0 %v976
        %978 = vmatprep.subr.mxu0 0.0
        %v979 = vand.u32 %v302, 4294901760
        %v980 = vsub.f32 %v302, %v979
        %981 = vmatpush1.msra.mxu0 %v980
        %982 = vmatprep.subr.mxu0 0.0
        %v983 = vand.u32 %v303, 4294901760
        %v984 = vsub.f32 %v303, %v983
        %985 = vmatpush1.msra.mxu0 %v984
        %986 = vmatprep.subr.mxu0 0.0
        %987 = vmatpush1.msra.mxu0 0.0
        %988 = vmatprep.subr.mxu0 0.0
        %989 = vmatpush1.msra.mxu0 0.0
        %990 = vmatprep.subr.mxu0 0.0
        %991 = vmatpush1.msra.mxu0 0.0
        %992 = vmatprep.subr.mxu0 0.0
        %993 = vmatpush1.msra.mxu0 0.0
        %994 = vmatprep.subr.mxu0 0.0
        %995 = vmatpush1.msra.mxu0 0.0
        %996 = vmatprep.subr.mxu0 0.0
        %997 = vmatpush1.msra.mxu0 0.0
        %998 = vmatprep.subr.mxu0 0.0
        %999 = vmatpush1.msra.mxu0 0.0
        %1000 = vmatprep.subr.mxu0 0.0
        %1001 = vmatpush1.msra.mxu0 0.0
        %1002 = vmatprep.subr.mxu0 0.0
        %1003 = vmatpush1.msra.mxu0 0.0
        %1004 = vmatprep.subr.mxu0 0.0
        %1005 = vmatpush1.msra.mxu0 0.0
        %1006 = vmatprep.subr.mxu0 0.0
        %1007 = vmatpush1.msra.mxu0 0.0
        %1008 = vmatprep.subr.mxu0 0.0
        %1009 = vmatpush1.msra.mxu0 0.0
        %1010 = vmatprep.subr.mxu0 0.0
        %1011 = vmatpush1.msra.mxu0 0.0
        %1012 = vmatprep.subr.mxu0 0.0
        %1013 = vmatpush1.msra.mxu0 0.0
        %1014 = vmatprep.subr.mxu0 0.0
        %1015 = vmatpush1.msra.mxu0 0.0
        %1016 = vmatprep.subr.mxu0 0.0
        %1017 = vmatpush1.msra.mxu0 0.0
        %1018 = vmatprep.subr.mxu0 0.0
        %1019 = vmatpush1.msra.mxu0 0.0
        %1020 = vmatprep.subr.mxu0 0.0
        %1021 = vmatpush1.msra.mxu0 0.0
        %1022 = vmatprep.subr.mxu0 0.0
        %1023 = vmatpush1.msra.mxu0 0.0
        %1024 = vmatprep.subr.mxu0 0.0
        %1025 = vmatpush1.msra.mxu0 0.0
        %1026 = vmatprep.subr.mxu0 0.0
        %1027 = vmatpush1.msra.mxu0 0.0
        %1028 = vmatprep.subr.mxu0 0.0
        %1029 = vmatpush1.msra.mxu0 0.0
        %1030 = vmatprep.subr.mxu0 0.0
        %1031 = vmatpush1.msra.mxu0 0.0
        %1032 = vmatprep.subr.mxu0 0.0
        %1033 = vmatpush1.msra.mxu0 0.0
        %1034 = vmatprep.subr.mxu0 0.0
        %1035 = vmatpush1.msra.mxu0 0.0
        %1036 = vmatprep.subr.mxu0 0.0
        %1037 = vmatpush1.msra.mxu0 0.0
        %1038 = vmatprep.subr.mxu0 0.0
        %1039 = vmatpush1.msra.mxu0 0.0
        %1040 = vmatprep.subr.mxu0 0.0
        %1041 = vmatpush1.msra.mxu0 0.0
        %1042 = vmatprep.mubr.f32.mxu0 0.0
        %v1043 = vand.u32 %v313, 4294901760
        %v1044 = vsub.f32 %v313, %v1043
        %1045 = vmatmul.mubr.f32.gmra.mrb[0].mxu0 %v1044
        %v1046 = vpop.f32.mrb[0].mxu0
        %v1047 = vadd.f32 %v967, %v1046
        %v1048 = vpop.f32.mrb[0].mxu0
        %1049 = vdwg.mxu0
        %1050 = vmatprep.subr.mxu0 0.0
        %v1051 = vand.u32 %v300, 4294901760
        %1052 = vmatpush1.msra.mxu0 %v1051
        %1053 = vmatprep.subr.mxu0 0.0
        %v1054 = vand.u32 %v301, 4294901760
        %1055 = vmatpush1.msra.mxu0 %v1054
        %1056 = vmatprep.subr.mxu0 0.0
        %v1057 = vand.u32 %v302, 4294901760
        %1058 = vmatpush1.msra.mxu0 %v1057
        %1059 = vmatprep.subr.mxu0 0.0
        %v1060 = vand.u32 %v303, 4294901760
        %1061 = vmatpush1.msra.mxu0 %v1060
        %1062 = vmatprep.subr.mxu0 0.0
        %1063 = vmatpush1.msra.mxu0 0.0
        %1064 = vmatprep.subr.mxu0 0.0
        %1065 = vmatpush1.msra.mxu0 0.0
        %1066 = vmatprep.subr.mxu0 0.0
        %1067 = vmatpush1.msra.mxu0 0.0
        %1068 = vmatprep.subr.mxu0 0.0
        %1069 = vmatpush1.msra.mxu0 0.0
        %1070 = vmatprep.subr.mxu0 0.0
        %1071 = vmatpush1.msra.mxu0 0.0
        %1072 = vmatprep.subr.mxu0 0.0
        %1073 = vmatpush1.msra.mxu0 0.0
        %1074 = vmatprep.subr.mxu0 0.0
        %1075 = vmatpush1.msra.mxu0 0.0
        %1076 = vmatprep.subr.mxu0 0.0
        %1077 = vmatpush1.msra.mxu0 0.0
        %1078 = vmatprep.subr.mxu0 0.0
        %1079 = vmatpush1.msra.mxu0 0.0
        %1080 = vmatprep.subr.mxu0 0.0
        %1081 = vmatpush1.msra.mxu0 0.0
        %1082 = vmatprep.subr.mxu0 0.0
        %1083 = vmatpush1.msra.mxu0 0.0
        %1084 = vmatprep.subr.mxu0 0.0
        %1085 = vmatpush1.msra.mxu0 0.0
        %1086 = vmatprep.subr.mxu0 0.0
        %1087 = vmatpush1.msra.mxu0 0.0
        %1088 = vmatprep.subr.mxu0 0.0
        %1089 = vmatpush1.msra.mxu0 0.0
        %1090 = vmatprep.subr.mxu0 0.0
        %1091 = vmatpush1.msra.mxu0 0.0
        %1092 = vmatprep.subr.mxu0 0.0
        %1093 = vmatpush1.msra.mxu0 0.0
        %1094 = vmatprep.subr.mxu0 0.0
        %1095 = vmatpush1.msra.mxu0 0.0
        %1096 = vmatprep.subr.mxu0 0.0
        %1097 = vmatpush1.msra.mxu0 0.0
        %1098 = vmatprep.subr.mxu0 0.0
        %1099 = vmatpush1.msra.mxu0 0.0
        %1100 = vmatprep.subr.mxu0 0.0
        %1101 = vmatpush1.msra.mxu0 0.0
        %1102 = vmatprep.subr.mxu0 0.0
        %1103 = vmatpush1.msra.mxu0 0.0
        %1104 = vmatprep.subr.mxu0 0.0
        %1105 = vmatpush1.msra.mxu0 0.0
        %1106 = vmatprep.subr.mxu0 0.0
        %1107 = vmatpush1.msra.mxu0 0.0
        %1108 = vmatprep.subr.mxu0 0.0
        %1109 = vmatpush1.msra.mxu0 0.0
        %1110 = vmatprep.subr.mxu0 0.0
        %1111 = vmatpush1.msra.mxu0 0.0
        %1112 = vmatprep.subr.mxu0 0.0
        %1113 = vmatpush1.msra.mxu0 0.0
        %1114 = vmatprep.subr.mxu0 0.0
        %1115 = vmatpush1.msra.mxu0 0.0
        %1116 = vmatprep.subr.mxu0 0.0
        %1117 = vmatpush1.msra.mxu0 0.0
        %1118 = vmatprep.mubr.f32.mxu0 0.0
        %v1119 = vand.u32 %v313, 4294901760
        %v1120 = vsub.f32 %v313, %v1119
        %v1121 = vand.u32 %v1120, 4294901760
        %1122 = vmatmul.mubr.f32.gmra.mrb[0].mxu0 %v1121
        %v1123 = vpop.f32.mrb[0].mxu0
        %v1124 = vadd.f32 %v1047, %v1123
        %v1125 = vpop.f32.mrb[0].mxu0
        %1126 = vdwg.mxu0
        %1127 = vmatprep.subr.mxu0 0.0
        %v1128 = vand.u32 %v300, 4294901760
        %v1129 = vsub.f32 %v300, %v1128
        %v1130 = vand.u32 %v1129, 4294901760
        %1131 = vmatpush1.msra.mxu0 %v1130
        %1132 = vmatprep.subr.mxu0 0.0
        %v1133 = vand.u32 %v301, 4294901760
        %v1134 = vsub.f32 %v301, %v1133
        %v1135 = vand.u32 %v1134, 4294901760
        %1136 = vmatpush1.msra.mxu0 %v1135
        %1137 = vmatprep.subr.mxu0 0.0
        %v1138 = vand.u32 %v302, 4294901760
        %v1139 = vsub.f32 %v302, %v1138
        %v1140 = vand.u32 %v1139, 4294901760
        %1141 = vmatpush1.msra.mxu0 %v1140
        %1142 = vmatprep.subr.mxu0 0.0
        %v1143 = vand.u32 %v303, 4294901760
        %v1144 = vsub.f32 %v303, %v1143
        %v1145 = vand.u32 %v1144, 4294901760
        %1146 = vmatpush1.msra.mxu0 %v1145
        %1147 = vmatprep.subr.mxu0 0.0
        %1148 = vmatpush1.msra.mxu0 0.0
        %1149 = vmatprep.subr.mxu0 0.0
        %1150 = vmatpush1.msra.mxu0 0.0
        %1151 = vmatprep.subr.mxu0 0.0
        %1152 = vmatpush1.msra.mxu0 0.0
        %1153 = vmatprep.subr.mxu0 0.0
        %1154 = vmatpush1.msra.mxu0 0.0
        %1155 = vmatprep.subr.mxu0 0.0
        %1156 = vmatpush1.msra.mxu0 0.0
        %1157 = vmatprep.subr.mxu0 0.0
        %1158 = vmatpush1.msra.mxu0 0.0
        %1159 = vmatprep.subr.mxu0 0.0
        %1160 = vmatpush1.msra.mxu0 0.0
        %1161 = vmatprep.subr.mxu0 0.0
        %1162 = vmatpush1.msra.mxu0 0.0
        %1163 = vmatprep.subr.mxu0 0.0
        %1164 = vmatpush1.msra.mxu0 0.0
        %1165 = vmatprep.subr.mxu0 0.0
        %1166 = vmatpush1.msra.mxu0 0.0
        %1167 = vmatprep.subr.mxu0 0.0
        %1168 = vmatpush1.msra.mxu0 0.0
        %1169 = vmatprep.subr.mxu0 0.0
        %1170 = vmatpush1.msra.mxu0 0.0
        %1171 = vmatprep.subr.mxu0 0.0
        %1172 = vmatpush1.msra.mxu0 0.0
        %1173 = vmatprep.subr.mxu0 0.0
        %1174 = vmatpush1.msra.mxu0 0.0
        %1175 = vmatprep.subr.mxu0 0.0
        %1176 = vmatpush1.msra.mxu0 0.0
        %1177 = vmatprep.subr.mxu0 0.0
        %1178 = vmatpush1.msra.mxu0 0.0
        %1179 = vmatprep.subr.mxu0 0.0
        %1180 = vmatpush1.msra.mxu0 0.0
        %1181 = vmatprep.subr.mxu0 0.0
        %1182 = vmatpush1.msra.mxu0 0.0
        %1183 = vmatprep.subr.mxu0 0.0
        %1184 = vmatpush1.msra.mxu0 0.0
        %1185 = vmatprep.subr.mxu0 0.0
        %1186 = vmatpush1.msra.mxu0 0.0
        %1187 = vmatprep.subr.mxu0 0.0
        %1188 = vmatpush1.msra.mxu0 0.0
        %1189 = vmatprep.subr.mxu0 0.0
        %1190 = vmatpush1.msra.mxu0 0.0
        %1191 = vmatprep.subr.mxu0 0.0
        %1192 = vmatpush1.msra.mxu0 0.0
        %1193 = vmatprep.subr.mxu0 0.0
        %1194 = vmatpush1.msra.mxu0 0.0
        %1195 = vmatprep.subr.mxu0 0.0
        %1196 = vmatpush1.msra.mxu0 0.0
        %1197 = vmatprep.subr.mxu0 0.0
        %1198 = vmatpush1.msra.mxu0 0.0
        %1199 = vmatprep.subr.mxu0 0.0
        %1200 = vmatpush1.msra.mxu0 0.0
        %1201 = vmatprep.subr.mxu0 0.0
        %1202 = vmatpush1.msra.mxu0 0.0
        %1203 = vmatprep.mubr.f32.mxu0 0.0
        %v1204 = vand.u32 %v313, 4294901760
        %1205 = vmatmul.mubr.f32.gmra.mrb[0].mxu0 %v1204
        %v1206 = vpop.f32.mrb[0].mxu0
        %v1207 = vadd.f32 %v1124, %v1206
        %v1208 = vpop.f32.mrb[0].mxu0
        %1209 = vdwg.mxu0
        %1210 = vmatprep.subr.mxu0 0.0
        %v1211 = vand.u32 %v300, 4294901760
        %1212 = vmatpush1.msra.mxu0 %v1211
        %1213 = vmatprep.subr.mxu0 0.0
        %v1214 = vand.u32 %v301, 4294901760
        %1215 = vmatpush1.msra.mxu0 %v1214
        %1216 = vmatprep.subr.mxu0 0.0
        %v1217 = vand.u32 %v302, 4294901760
        %1218 = vmatpush1.msra.mxu0 %v1217
        %1219 = vmatprep.subr.mxu0 0.0
        %v1220 = vand.u32 %v303, 4294901760
        %1221 = vmatpush1.msra.mxu0 %v1220
        %1222 = vmatprep.subr.mxu0 0.0
        %1223 = vmatpush1.msra.mxu0 0.0
        %1224 = vmatprep.subr.mxu0 0.0
        %1225 = vmatpush1.msra.mxu0 0.0
        %1226 = vmatprep.subr.mxu0 0.0
        %1227 = vmatpush1.msra.mxu0 0.0
        %1228 = vmatprep.subr.mxu0 0.0
        %1229 = vmatpush1.msra.mxu0 0.0
        %1230 = vmatprep.subr.mxu0 0.0
        %1231 = vmatpush1.msra.mxu0 0.0
        %1232 = vmatprep.subr.mxu0 0.0
        %1233 = vmatpush1.msra.mxu0 0.0
        %1234 = vmatprep.subr.mxu0 0.0
        %1235 = vmatpush1.msra.mxu0 0.0
        %1236 = vmatprep.subr.mxu0 0.0
        %1237 = vmatpush1.msra.mxu0 0.0
        %1238 = vmatprep.subr.mxu0 0.0
        %1239 = vmatpush1.msra.mxu0 0.0
        %1240 = vmatprep.subr.mxu0 0.0
        %1241 = vmatpush1.msra.mxu0 0.0
        %1242 = vmatprep.subr.mxu0 0.0
        %1243 = vmatpush1.msra.mxu0 0.0
        %1244 = vmatprep.subr.mxu0 0.0
        %1245 = vmatpush1.msra.mxu0 0.0
        %1246 = vmatprep.subr.mxu0 0.0
        %1247 = vmatpush1.msra.mxu0 0.0
        %1248 = vmatprep.subr.mxu0 0.0
        %1249 = vmatpush1.msra.mxu0 0.0
        %1250 = vmatprep.subr.mxu0 0.0
        %1251 = vmatpush1.msra.mxu0 0.0
        %1252 = vmatprep.subr.mxu0 0.0
        %1253 = vmatpush1.msra.mxu0 0.0
        %1254 = vmatprep.subr.mxu0 0.0
        %1255 = vmatpush1.msra.mxu0 0.0
        %1256 = vmatprep.subr.mxu0 0.0
        %1257 = vmatpush1.msra.mxu0 0.0
        %1258 = vmatprep.subr.mxu0 0.0
        %1259 = vmatpush1.msra.mxu0 0.0
        %1260 = vmatprep.subr.mxu0 0.0
        %1261 = vmatpush1.msra.mxu0 0.0
        %1262 = vmatprep.subr.mxu0 0.0
        %1263 = vmatpush1.msra.mxu0 0.0
        %1264 = vmatprep.subr.mxu0 0.0
        %1265 = vmatpush1.msra.mxu0 0.0
        %1266 = vmatprep.subr.mxu0 0.0
        %1267 = vmatpush1.msra.mxu0 0.0
        %1268 = vmatprep.subr.mxu0 0.0
        %1269 = vmatpush1.msra.mxu0 0.0
        %1270 = vmatprep.subr.mxu0 0.0
        %1271 = vmatpush1.msra.mxu0 0.0
        %1272 = vmatprep.subr.mxu0 0.0
        %1273 = vmatpush1.msra.mxu0 0.0
        %1274 = vmatprep.subr.mxu0 0.0
        %1275 = vmatpush1.msra.mxu0 0.0
        %1276 = vmatprep.subr.mxu0 0.0
        %1277 = vmatpush1.msra.mxu0 0.0
        %1278 = vmatprep.mubr.f32.mxu0 0.0
        %v1279 = vand.u32 %v313, 4294901760
        %1280 = vmatmul.mubr.f32.gmra.mrb[0].mxu0 %v1279
        %v1281 = vpop.f32.mrb[0].mxu0
        %v1282 = vadd.f32 %v1207, %v1281
        %v1283 = vpop.f32.mrb[0].mxu0
        %1284 = vdwg.mxu0
        %vm1285 = vcmask 27648
        %v1286 = vsel %vm1285, %v797, -inf
        %1287 = vmax.xlane.f32.xlu0 %v1286
        %v1288 = vpop.xlane.xlu0 %1287
        %v1289 = vsub.f32 %v797, %v1288
        %v1290 = vmul.f32 %v1289, 1.442695
        %v1291 = vpow.pop %v1290
        %v1292 = vsel %vm1285, %v1291, 0.0
        %1293 = vadd.xlane.f32.xlu0 %v1292
        %v1294 = vpop.xlane.xlu0 %1293
        %v1295 = vsub.f32 %v1282, 10.0
        %v1296 = vmul.f32 %v1295, 1.442695
        %v1297 = vpow.pop %v1296
        %v1298 = vsel %vm1285, %v1297, 0.0
        %1299 = vadd.xlane.f32.xlu0 %v1298
        %v1300 = vpop.xlane.xlu0 %1299
        %v1301 = vsub.f32 %v1300, 1.0
        %v1302 = vmul.f32 %v309, %v310
        %vm1303 = vcmask 257024
        %v1304 = vsel %vm1303, %v1302, 0.0
        %1305 = vadd.xlane.f32.xlu0 %v1304
        %v1306 = vpop.xlane.xlu0 %1305
        %v1307 = vsub.f32 %v1306, %v1288
        %v1308 = vadd.f32 %v1294, %v1301
        %v1309 = vlog2.pop %v1308
        %v1310 = vmul.f32 %v1309, 0.6931472
        %v1311 = vsub.f32 %v1307, %v1310
        %vm1312 = vcmask 3072
        %v1313 = vsel %vm1312, %v1311, 0.0
        %1314 = vadd.xlane.f32.xlu0 %v1313
        %v1315 = vpop.xlane.xlu0 %1314
        %v1316 = vrot.slane %v1315, 4
        %v1317 = vadd.f32 %v1315, %v1316
        %v1318 = vrot.slane %v1317, 2
        %v1319 = vadd.f32 %v1317, %v1318
        %v1320 = vrot.slane %v1319, 1
        %v1321 = vadd.f32 %v1319, %v1320
        %s1322 = vtos %v1321
        %v1323 = vstv %s1322
        %1324 = vst [vmem:[%s271] sm:$0xff] %v1323
        %s1325 = sand.u32 %s152, 1
        %s1326 = scalar_lea.sflag [#allocation3], %s1325
        %s1327 = sand.u32 %s152, 1
        %s1328 = smul.addr %s1327, 8
        %s1329 = scalar_lea.vmem [#allocation2], %s1328
        // Predicated region
        $region37: #{tpu_custom_call.1} parent=35 // pred_check
          %p1330 = pneg %p162
        $region38: #{tpu_custom_call.1} parent=35 // pred_check_branch
          %1332 = sbr.rel (%p1330) target = $region40
        $region39: #{tpu_custom_call.1} parent=35 // pred_region
          %s1334 = ssub.s32 128, 128
          %1335 = vsyncadd %s1326, %s1334
          %s1336 = sadd.s32 %s23, %s22
          %s1337 = smul.addr %s1336, 128
          %s1338 = scalar_lea.hbm %s4, %s1337
          %s1340 = sshll.u32 %s1329, 4
          %s1341 = int_to_ptr.vmem [resolvable:$true] %s1340
          %1343 = dma.vmem_to_hbm [thread:$0]  %s1341, 128, %s1338, %s1326
        $region40: #{tpu_custom_call.1} parent=35 // pred_fallthru
          _
      $region36: #{tpu_custom_call.1} parent=5 // pred_fallthru
        _
      %p1344 = scmp.le.s32.totalorder 2, %s13
      // Predicated region
      $region41: #{tpu_custom_call.1} parent=5 // pred_check
        %p1345 = pneg %p1344
      $region42: #{tpu_custom_call.1} parent=5 // pred_check_branch
        %1347 = sbr.rel (%p1345) target = $region44
      $region43: #{tpu_custom_call.1} parent=5 // pred_region
        %s1348 = ssub.s32 %s13, 2
        // Predicated region
        $region45: #{tpu_custom_call.1} parent=43 // pred_check
          %p1349 = pneg %p168
        $region46: #{tpu_custom_call.1} parent=43 // pred_check_branch
          %1351 = sbr.rel (%p1349) target = $region48
        $region47: #{tpu_custom_call.1} parent=43 // pred_region
          %s1352 = sand.u32 %s153, 1
          %s1353 = scalar_lea.sflag [#allocation3], %s1352
          %s1354 = sand.u32 %s153, 1
          %s1355 = smul.addr %s1354, 8
          %s1356 = scalar_lea.vmem [#allocation2], %s1355
          %1357 = dma.done %s1353, 128
        $region48: #{tpu_custom_call.1} parent=43 // pred_fallthru
          _
      $region44: #{tpu_custom_call.1} parent=5 // pred_fallthru
        _
    $region6: #{tpu_custom_call.1} parent=1 // loop_footer
      %s17 = sadd.s32 1, %s13
    $region7: #{tpu_custom_call.1} parent=1 // loop_footer_branch
      %12 = sbr.rel target = $region3
    $region8: #{tpu_custom_call.1} parent=1 // loop_exit
      _
    %1358 = vsyncpa [#allocation3], 1
    %s1359 = scalar_lea.sflag [#allocation3], 1
    %1360 = vsyncpa %s1359, 1

</llo_original>
